<compile_context>
chip_gen: v7x
topology: tpu7x:2x2x1
jax: 0.10.0
libtpu: 0.0.40
codegen_flags: <defaults>
</compile_context>

<pallas_src>
import functools

import jax
import jax.numpy as jnp
from jax.experimental import pallas as pl
from jax.experimental.pallas import tpu as pltpu


def _policy_kernel(x_ref, w1_ref, b1_ref, w2_ref, b2_ref, wh_ref, bh_ref,
                   out_ref):
    # Hidden layer 1: Linear + ReLU
    h = jnp.dot(x_ref[...], w1_ref[...], preferred_element_type=jnp.float32)
    h = jnp.maximum(h + b1_ref[...], 0.0)

    # Hidden layer 2: Linear + ReLU
    h = jnp.dot(h, w2_ref[...], preferred_element_type=jnp.float32)
    h = jnp.maximum(h + b2_ref[...], 0.0)

    # Policy head: Linear (output lanes are padded to a multiple of 128; the
    # padded lanes carry a -1e30 bias so exp() underflows to exactly 0 below).
    logits = jnp.dot(h, wh_ref[...], preferred_element_type=jnp.float32)
    logits = logits + bh_ref[...]

    # Numerically-stable softmax over the last axis.
    m = jnp.max(logits, axis=-1, keepdims=True)
    e = jnp.exp(logits - m)
    denom = jnp.sum(e, axis=-1, keepdims=True)
    # EUP reciprocal (approx=False to stay within 1e-5 of the reference).
    out_ref[...] = e * pl.reciprocal(denom, approx=False)


def _round_up(n, m):
    return ((n + m - 1) // m) * m


@functools.partial(jax.jit, static_argnames=("tb",))
def policy_forward(x, w1, b1, w2, b2, wh, bh, *, tb=128):
    B, in_dim = x.shape
    num_actions = wh.shape[1]

    # --- Lane-dense output: pad the action dimension to a multiple of 128. ---
    na_pad = _round_up(max(num_actions, 128), 128)
    wh_p = jnp.pad(wh, ((0, 0), (0, na_pad - num_actions)))
    # Padded bias lanes get a huge negative value -> exp(logit - max) == 0,
    # so no probability mass leaks into the padding.
    bh_p = jnp.pad(bh, ((0, 0), (0, na_pad - num_actions)),
                   constant_values=-1e30)

    # --- Batch tiling (sublane axis). Keep TB a multiple of 8, <= requested. ---
    tb = min(tb, max(8, _round_up(B, 8)))
    b_pad = _round_up(B, tb)
    x_p = jnp.pad(x, ((0, b_pad - B), (0, 0)))

    grid = (b_pad // tb,)

    out = pl.pallas_call(
        _policy_kernel,
        out_shape=jax.ShapeDtypeStruct((b_pad, na_pad), jnp.float32),
        grid_spec=pl.GridSpec(
            grid=grid,
            in_specs=[
                # Activations: one batch tile per grid step (double-buffered).
                pl.BlockSpec((tb, in_dim), lambda i: (i, 0)),
                # Weights / biases: constant index_map -> VMEM-resident.
                pl.BlockSpec(w1.shape, lambda i: (0, 0)),
                pl.BlockSpec(b1.shape, lambda i: (0, 0)),
                pl.BlockSpec(w2.shape, lambda i: (0, 0)),
                pl.BlockSpec(b2.shape, lambda i: (0, 0)),
                pl.BlockSpec(wh_p.shape, lambda i: (0, 0)),
                pl.BlockSpec(bh_p.shape, lambda i: (0, 0)),
            ],
            out_specs=pl.BlockSpec((tb, na_pad), lambda i: (i, 0)),
        ),
        compiler_params=pltpu.CompilerParams(
            # Batch axis is fully independent -> shard across TCs on v7x.
            dimension_semantics=("parallel",),
            # Sized against v7x's 64 MiB VMEM (far below it at these dims).
            vmem_limit_bytes=64 * 1024 * 1024,
        ),
    )(x_p, w1, b1, w2, b2, wh_p, bh_p)

    # Strip batch and lane padding.
    return out[:B, :num_actions]


def init_linear(key, fan_in, fan_out):
    """PyTorch-style default init: U(-1/sqrt(fan_in), 1/sqrt(fan_in))."""
    kw, kb = jax.random.split(key)
    bound = 1.0 / jnp.sqrt(jnp.float32(fan_in))
    # Stored as (in, out) — already "transposed" relative to torch's (out, in).
    w = jax.random.uniform(kw, (fan_in, fan_out), jnp.float32, -bound, bound)
    b = jax.random.uniform(kb, (1, fan_out), jnp.float32, -bound, bound)
    return w, b


def reference_forward(x, w1, b1, w2, b2, wh, bh):
    h = jnp.maximum(x @ w1 + b1, 0.0)
    h = jnp.maximum(h @ w2 + b2, 0.0)
    logits = h @ wh + bh
    return jax.nn.softmax(logits, axis=-1)


if __name__ == "__main__":
    # PolicyNetwork(root_output=32, layers=[64, 32], num_actions=5)
    root_output = 32
    hidden = [64, 32]
    num_actions = 5
    # Batched inference: amortizes per-call overhead and exercises the batch
    # grid (two 128-row tiles).
    batch = 256

    key = jax.random.PRNGKey(0)
    k_x, k1, k2, k3 = jax.random.split(key, 4)

    x = jax.random.normal(k_x, (batch, root_output), jnp.float32)

    w1, b1 = init_linear(k1, root_output, hidden[0])
    w2, b2 = init_linear(k2, hidden[0], hidden[1])
    wh, bh = init_linear(k3, hidden[1], num_actions)

    policy = policy_forward(x, w1, b1, w2, b2, wh, bh)
    policy = jax.block_until_ready(policy)

    ref = reference_forward(x, w1, b1, w2, b2, wh, bh)
    assert policy.shape == (batch, num_actions)
    assert jnp.allclose(jnp.sum(policy, axis=-1), 1.0, atol=1e-5)
    assert jnp.allclose(policy, ref, atol=1e-5)

    # Also check a tiny, non-tile-aligned batch (pads to 8 sublanes).
    x_small = x[:2]
    policy_small = jax.block_until_ready(
        policy_forward(x_small, w1, b1, w2, b2, wh, bh))
    ref_small = reference_forward(x_small, w1, b1, w2, b2, wh, bh)
    assert policy_small.shape == (2, num_actions)
    assert jnp.allclose(policy_small, ref_small, atol=1e-5)

    print("KERNEL_OK")
</pallas_src>

<mosaic_0001>
module attributes {stable_mosaic.version = 11 : i64} {
  func.func @_policy_kernel(%arg0: i32, %arg1: memref<128x32xf32, #tpu.memory_space<vmem>>, %arg2: memref<32x64xf32, #tpu.memory_space<vmem>>, %arg3: memref<1x64xf32, #tpu.memory_space<vmem>>, %arg4: memref<64x32xf32, #tpu.memory_space<vmem>>, %arg5: memref<1x32xf32, #tpu.memory_space<vmem>>, %arg6: memref<32x128xf32, #tpu.memory_space<vmem>>, %arg7: memref<1x128xf32, #tpu.memory_space<vmem>>, %arg8: memref<128x128xf32, #tpu.memory_space<vmem>>) attributes {dimension_semantics = [#tpu.dimension_semantics<parallel>], iteration_bounds = array<i64: 2>, scalar_prefetch = 0 : i64, scratch_operands = 0 : i64, tpu.core_type = #tpu.core_type<tc>, window_params = [{transform_indices = @transform_0, window_bounds = array<i64: 128, 32>}, {pipeline_mode = #tpu.pipeline_mode<synchronous>, transform_indices = @transform_1, window_bounds = array<i64: 32, 64>}, {pipeline_mode = #tpu.pipeline_mode<synchronous>, transform_indices = @transform_2, window_bounds = array<i64: 1, 64>}, {pipeline_mode = #tpu.pipeline_mode<synchronous>, transform_indices = @transform_3, window_bounds = array<i64: 64, 32>}, {pipeline_mode = #tpu.pipeline_mode<synchronous>, transform_indices = @transform_4, window_bounds = array<i64: 1, 32>}, {pipeline_mode = #tpu.pipeline_mode<synchronous>, transform_indices = @transform_5, window_bounds = array<i64: 32, 128>}, {pipeline_mode = #tpu.pipeline_mode<synchronous>, transform_indices = @transform_6, window_bounds = array<i64: 1, 128>}, {transform_indices = @transform_7, window_bounds = array<i64: 128, 128>}]} {
    %c0 = arith.constant 0 : index
    %c0_0 = arith.constant 0 : index
    %0 = vector.load %arg1[%c0, %c0_0] : memref<128x32xf32, #tpu.memory_space<vmem>>, vector<128x32xf32>
    %c0_1 = arith.constant 0 : index
    %c0_2 = arith.constant 0 : index
    %1 = vector.load %arg2[%c0_1, %c0_2] : memref<32x64xf32, #tpu.memory_space<vmem>>, vector<32x64xf32>
    %cst = arith.constant dense<0.000000e+00> : vector<128x64xf32>
    %2 = tpu.matmul %0, %1, %cst {dimension_numbers = #tpu.dot_dimension_numbers<[1], [0], [0], [1], [0, 0, 1, 1], [], []>} : vector<128x32xf32>, vector<32x64xf32>, vector<128x64xf32> -> vector<128x64xf32>
    %c0_3 = arith.constant 0 : index
    %c0_4 = arith.constant 0 : index
    %3 = vector.load %arg3[%c0_3, %c0_4] : memref<1x64xf32, #tpu.memory_space<vmem>>, vector<1x64xf32>
    %4 = vector.broadcast %3 : vector<1x64xf32> to vector<128x64xf32>
    %5 = arith.addf %2, %4 : vector<128x64xf32>
    %cst_5 = arith.constant 0.000000e+00 : f32
    %6 = vector.broadcast %cst_5 : f32 to vector<128x64xf32>
    %7 = arith.maximumf %5, %6 : vector<128x64xf32>
    %c0_6 = arith.constant 0 : index
    %c0_7 = arith.constant 0 : index
    %8 = vector.load %arg4[%c0_6, %c0_7] : memref<64x32xf32, #tpu.memory_space<vmem>>, vector<64x32xf32>
    %cst_8 = arith.constant dense<0.000000e+00> : vector<128x32xf32>
    %9 = tpu.matmul %7, %8, %cst_8 {dimension_numbers = #tpu.dot_dimension_numbers<[1], [0], [0], [1], [0, 0, 1, 1], [], []>} : vector<128x64xf32>, vector<64x32xf32>, vector<128x32xf32> -> vector<128x32xf32>
    %c0_9 = arith.constant 0 : index
    %c0_10 = arith.constant 0 : index
    %10 = vector.load %arg5[%c0_9, %c0_10] : memref<1x32xf32, #tpu.memory_space<vmem>>, vector<1x32xf32>
    %11 = vector.broadcast %10 : vector<1x32xf32> to vector<128x32xf32>
    %12 = arith.addf %9, %11 : vector<128x32xf32>
    %cst_11 = arith.constant 0.000000e+00 : f32
    %13 = vector.broadcast %cst_11 : f32 to vector<128x32xf32>
    %14 = arith.maximumf %12, %13 : vector<128x32xf32>
    %c0_12 = arith.constant 0 : index
    %c0_13 = arith.constant 0 : index
    %15 = vector.load %arg6[%c0_12, %c0_13] : memref<32x128xf32, #tpu.memory_space<vmem>>, vector<32x128xf32>
    %cst_14 = arith.constant dense<0.000000e+00> : vector<128x128xf32>
    %16 = tpu.matmul %14, %15, %cst_14 {dimension_numbers = #tpu.dot_dimension_numbers<[1], [0], [0], [1], [0, 0, 1, 1], [], []>} : vector<128x32xf32>, vector<32x128xf32>, vector<128x128xf32> -> vector<128x128xf32>
    %c0_15 = arith.constant 0 : index
    %c0_16 = arith.constant 0 : index
    %17 = vector.load %arg7[%c0_15, %c0_16] : memref<1x128xf32, #tpu.memory_space<vmem>>, vector<1x128xf32>
    %18 = vector.broadcast %17 : vector<1x128xf32> to vector<128x128xf32>
    %19 = arith.addf %16, %18 : vector<128x128xf32>
    %cst_17 = arith.constant dense<0xFF800000> : vector<128xf32>
    %20 = vector.multi_reduction <maximumf>, %19, %cst_17 [1] : vector<128x128xf32> to vector<128xf32>
    %21 = vector.shape_cast %20 : vector<128xf32> to vector<128x1xf32>
    %22 = vector.broadcast %21 : vector<128x1xf32> to vector<128x128xf32>
    %23 = arith.subf %19, %22 : vector<128x128xf32>
    %24 = math.exp %23 : vector<128x128xf32>
    %cst_18 = arith.constant dense<0.000000e+00> : vector<128xf32>
    %25 = vector.multi_reduction <add>, %24, %cst_18 [1] : vector<128x128xf32> to vector<128xf32>
    %26 = vector.shape_cast %25 : vector<128xf32> to vector<128x1xf32>
    %27 = tpu.reciprocal %26 : vector<128x1xf32> -> vector<128x1xf32>
    %28 = vector.broadcast %27 : vector<128x1xf32> to vector<128x128xf32>
    %29 = arith.mulf %24, %28 : vector<128x128xf32>
    %c0_19 = arith.constant 0 : index
    %c0_20 = arith.constant 0 : index
    %30 = vector.load %arg8[%c0_19, %c0_20] : memref<128x128xf32, #tpu.memory_space<vmem>>, vector<128x128xf32>
    tpu.vector_store %arg8[%c0_19, %c0_20], %29 {strides = array<i32>} : memref<128x128xf32, #tpu.memory_space<vmem>>, vector<128x128xf32>,
    return
  }
  func.func @transform_0(%arg0: i32) -> (i32, i32) {
    %c0_i32 = arith.constant 0 : i32
    %c0_i32_0 = arith.constant 0 : i32
    return %arg0, %c0_i32 : i32, i32
  }
  func.func @transform_1(%arg0: i32) -> (i32, i32) {
    %c0_i32 = arith.constant 0 : i32
    %c0_i32_0 = arith.constant 0 : i32
    %c0_i32_1 = arith.constant 0 : i32
    return %c0_i32, %c0_i32_0 : i32, i32
  }
  func.func @transform_2(%arg0: i32) -> (i32, i32) {
    %c0_i32 = arith.constant 0 : i32
    %c0_i32_0 = arith.constant 0 : i32
    %c0_i32_1 = arith.constant 0 : i32
    return %c0_i32, %c0_i32_0 : i32, i32
  }
  func.func @transform_3(%arg0: i32) -> (i32, i32) {
    %c0_i32 = arith.constant 0 : i32
    %c0_i32_0 = arith.constant 0 : i32
    %c0_i32_1 = arith.constant 0 : i32
    return %c0_i32, %c0_i32_0 : i32, i32
  }
  func.func @transform_4(%arg0: i32) -> (i32, i32) {
    %c0_i32 = arith.constant 0 : i32
    %c0_i32_0 = arith.constant 0 : i32
    %c0_i32_1 = arith.constant 0 : i32
    return %c0_i32, %c0_i32_0 : i32, i32
  }
  func.func @transform_5(%arg0: i32) -> (i32, i32) {
    %c0_i32 = arith.constant 0 : i32
    %c0_i32_0 = arith.constant 0 : i32
    %c0_i32_1 = arith.constant 0 : i32
    return %c0_i32, %c0_i32_0 : i32, i32
  }
  func.func @transform_6(%arg0: i32) -> (i32, i32) {
    %c0_i32 = arith.constant 0 : i32
    %c0_i32_0 = arith.constant 0 : i32
    %c0_i32_1 = arith.constant 0 : i32
    return %c0_i32, %c0_i32_0 : i32, i32
  }
  func.func @transform_7(%arg0: i32) -> (i32, i32) {
    %c0_i32 = arith.constant 0 : i32
    %c0_i32_0 = arith.constant 0 : i32
    return %arg0, %c0_i32 : i32, i32
  }
}

</mosaic_0001>

<llo_original>
// kernel: policy_forward.1
$region0: #{policy_forward.1}
  #allocation0 [shape = 'u32[]', space=smem, size = 0x4, offset = 0x4, fixed_abs, tag = 'smem constant byte address 0x4 - core index']
  #allocation1 [shape = 'u32[144,128]{1,0:T(1,128)}', space=vmem, size = 0x12000, scoped, tag = 'internal scratch']
  %s0 = inlined_call_operand.hbm [shape: f32[256,32], index: 0, kind: input, shape index: {}]
  %s1 = inlined_call_operand.hbm [shape: f32[32,64], index: 1, kind: input, shape index: {}]
  %s2 = inlined_call_operand.hbm [shape: f32[1,64], index: 2, kind: input, shape index: {}]
  %s3 = inlined_call_operand.hbm [shape: f32[64,32], index: 3, kind: input, shape index: {}]
  %s4 = inlined_call_operand.hbm [shape: f32[1,32], index: 4, kind: input, shape index: {}]
  %s5 = inlined_call_operand.hbm [shape: f32[32,128], index: 5, kind: input, shape index: {}]
  %s6 = inlined_call_operand.hbm [shape: f32[1,128], index: 6, kind: input, shape index: {}]
  %s7 = inlined_call_operand.hbm [shape: f32[256,128], index: 7, kind: output, shape index: {}]
  %s8 = sld [smem:[#allocation0]]
  $region89: #{policy_forward.1} parent=0
    _
  %s10 = ssub.s32 1, %s8
  %s11 = scalar_select 0, %s10, %s8
  $region1: #{policy_forward.1} parent=0
    #allocation2 [shape = 'u8[131072]{0}', space=vmem, size = 0x20000, scoped, tag = 'input window, operand 0']
    #allocation3 [shape = 's32[2]{0}', space=sflag, size = 0x8, scoped, tag = 'scoped memory for policy_forward.1']
    #allocation4 [shape = 's32[2]{0}', space=sflag, size = 0x8, scoped, tag = 'scoped memory for policy_forward.1']
    #allocation5 [shape = 'u8[16384]{0}', space=vmem, size = 0x4000, scoped, tag = 'input window, operand 1, single buffered']
    #allocation6 [shape = 's32[1]{0}', space=sflag, size = 0x4, scoped, tag = 'scoped memory for policy_forward.1']
    #allocation7 [shape = 'u8[512]{0}', space=vmem, size = 0x400, scoped, tag = 'input window, operand 2, single buffered']
    #allocation8 [shape = 'u8[32768]{0}', space=vmem, size = 0x8000, scoped, tag = 'input window, operand 3, single buffered']
    #allocation9 [shape = 's32[1]{0}', space=sflag, size = 0x4, scoped, tag = 'scoped memory for policy_forward.1']
    #allocation10 [shape = 'u8[512]{0}', space=vmem, size = 0x400, scoped, tag = 'input window, operand 4, single buffered']
    #allocation11 [shape = 'u8[16384]{0}', space=vmem, size = 0x4000, scoped, tag = 'input window, operand 5, single buffered']
    #allocation12 [shape = 's32[1]{0}', space=sflag, size = 0x4, scoped, tag = 'scoped memory for policy_forward.1']
    #allocation13 [shape = 'u8[512]{0}', space=vmem, size = 0x400, scoped, tag = 'input window, operand 6, single buffered']
    #allocation14 [shape = 'u8[131072]{0}', space=vmem, size = 0x20000, scoped, tag = 'output window, operand 0']
    %12 = vsyncpa [#allocation3], 0
    %s13 = scalar_lea.sflag [#allocation3], 1
    %14 = vsyncpa %s13, 0
    %15 = vsyncpa [#allocation6], 0
    %16 = vsyncpa [#allocation9], 0
    %17 = vsyncpa [#allocation12], 0
    %18 = vsyncpa [#allocation4], 0
    %s19 = scalar_lea.sflag [#allocation4], 1
    %20 = vsyncpa %s19, 0
    loop: start=0, step=1, limit=4
    $region2: #{policy_forward.1} parent=1 // loop_pre_header
      _
    $region3: #{policy_forward.1} parent=1 // loop_header
      %s22 = sphi 0, %s26
      %p23 = scmp.ge.s32.totalorder %s22, 4
      %s32 = sphi 0, %s34
      %s35 = sphi 0, %s32
      %s36 = sphi 0, %s35
      %s52 = sphi 0, %s36
      %s56 = sphi 0, %s56
      %s58 = sphi 0, %s56
      %s59 = sphi 0, %s58
      %s73 = sphi 0, %s59
      %s77 = sphi 0, %s77
      %s79 = sphi 0, %s77
      %s80 = sphi 0, %s79
      %s94 = sphi 0, %s80
      %s98 = sphi 0, %s98
      %s100 = sphi 0, %s98
      %s101 = sphi 0, %s100
      %s115 = sphi 0, %s101
      %s119 = sphi 0, %s119
      %s121 = sphi 0, %s119
      %s122 = sphi 0, %s121
      %s136 = sphi 0, %s122
      %s140 = sphi 0, %s140
      %s142 = sphi 0, %s140
      %s143 = sphi 0, %s142
      %s157 = sphi 0, %s143
      %s161 = sphi 0, %s161
      %s163 = sphi 0, %s161
      %s164 = sphi 0, %s163
      %s178 = sphi 0, %s164
      %s184 = sphi 0, %s186
      %s187 = sphi 0, %s184
      %s188 = sphi 0, %s187
      %s204 = sphi 0, %s188
    $region4: #{policy_forward.1} parent=1 // loop_header_branch
      %25 = sbr.rel (%p23) target = $region8
    $region5: #{policy_forward.1} parent=1 // loop_body
      %s27 = ssub.s32 %s22, 1
      %s28 = ssub.s32 %s22, 2
      %s29 = sadd.s32 %s22, 1
      %s30 = ssub.s32 %s22, %s29
      %p31 = scmp.eq.s32.totalorder %s30, 0
      %s33 = sadd.s32 %s32, 1
      %s34 = scalar_select %p31, %s32, %s33
      %p37 = pneg %p31
      %p38 = scmp.eq.s32.totalorder %s22, 1
      %p39 = por %p37, %p38
      %p40 = scmp.ne.s32.totalorder %s32, %s35
      %p41 = scmp.eq.s32.totalorder %s22, 0
      %p42 = por %p40, %p41
      %p43 = scmp.ne.s32.totalorder %s32, %s35
      %p44 = scmp.eq.s32.totalorder %s27, 1
      %p45 = por %p43, %p44
      %p46 = scmp.ne.s32.totalorder %s35, %s36
      %p47 = scmp.eq.s32.totalorder %s27, 0
      %p48 = por %p46, %p47
      %p49 = scmp.ne.s32.totalorder %s35, %s36
      %p50 = scmp.eq.s32.totalorder %s28, 1
      %p51 = por %p49, %p50
      %p53 = scmp.ne.s32.totalorder %s36, %s52
      %p54 = scmp.eq.s32.totalorder %s28, 0
      %p55 = por %p53, %p54
      %s57 = sadd.s32 %s56, 1
      %p60 = scmp.eq.s32.totalorder %s22, 1
      %p61 = scmp.ne.s32.totalorder %s56, %s58
      %p62 = scmp.eq.s32.totalorder %s22, 0
      %p63 = por %p61, %p62
      %p64 = scmp.ne.s32.totalorder %s56, %s58
      %p65 = scmp.eq.s32.totalorder %s27, 1
      %p66 = por %p64, %p65
      %p67 = scmp.ne.s32.totalorder %s58, %s59
      %p68 = scmp.eq.s32.totalorder %s27, 0
      %p69 = por %p67, %p68
      %p70 = scmp.ne.s32.totalorder %s58, %s59
      %p71 = scmp.eq.s32.totalorder %s28, 1
      %p72 = por %p70, %p71
      %p74 = scmp.ne.s32.totalorder %s59, %s73
      %p75 = scmp.eq.s32.totalorder %s28, 0
      %p76 = por %p74, %p75
      %s78 = sadd.s32 %s77, 1
      %p81 = scmp.eq.s32.totalorder %s22, 1
      %p82 = scmp.ne.s32.totalorder %s77, %s79
      %p83 = scmp.eq.s32.totalorder %s22, 0
      %p84 = por %p82, %p83
      %p85 = scmp.ne.s32.totalorder %s77, %s79
      %p86 = scmp.eq.s32.totalorder %s27, 1
      %p87 = por %p85, %p86
      %p88 = scmp.ne.s32.totalorder %s79, %s80
      %p89 = scmp.eq.s32.totalorder %s27, 0
      %p90 = por %p88, %p89
      %p91 = scmp.ne.s32.totalorder %s79, %s80
      %p92 = scmp.eq.s32.totalorder %s28, 1
      %p93 = por %p91, %p92
      %p95 = scmp.ne.s32.totalorder %s80, %s94
      %p96 = scmp.eq.s32.totalorder %s28, 0
      %p97 = por %p95, %p96
      %s99 = sadd.s32 %s98, 1
      %p102 = scmp.eq.s32.totalorder %s22, 1
      %p103 = scmp.ne.s32.totalorder %s98, %s100
      %p104 = scmp.eq.s32.totalorder %s22, 0
      %p105 = por %p103, %p104
      %p106 = scmp.ne.s32.totalorder %s98, %s100
      %p107 = scmp.eq.s32.totalorder %s27, 1
      %p108 = por %p106, %p107
      %p109 = scmp.ne.s32.totalorder %s100, %s101
      %p110 = scmp.eq.s32.totalorder %s27, 0
      %p111 = por %p109, %p110
      %p112 = scmp.ne.s32.totalorder %s100, %s101
      %p113 = scmp.eq.s32.totalorder %s28, 1
      %p114 = por %p112, %p113
      %p116 = scmp.ne.s32.totalorder %s101, %s115
      %p117 = scmp.eq.s32.totalorder %s28, 0
      %p118 = por %p116, %p117
      %s120 = sadd.s32 %s119, 1
      %p123 = scmp.eq.s32.totalorder %s22, 1
      %p124 = scmp.ne.s32.totalorder %s119, %s121
      %p125 = scmp.eq.s32.totalorder %s22, 0
      %p126 = por %p124, %p125
      %p127 = scmp.ne.s32.totalorder %s119, %s121
      %p128 = scmp.eq.s32.totalorder %s27, 1
      %p129 = por %p127, %p128
      %p130 = scmp.ne.s32.totalorder %s121, %s122
      %p131 = scmp.eq.s32.totalorder %s27, 0
      %p132 = por %p130, %p131
      %p133 = scmp.ne.s32.totalorder %s121, %s122
      %p134 = scmp.eq.s32.totalorder %s28, 1
      %p135 = por %p133, %p134
      %p137 = scmp.ne.s32.totalorder %s122, %s136
      %p138 = scmp.eq.s32.totalorder %s28, 0
      %p139 = por %p137, %p138
      %s141 = sadd.s32 %s140, 1
      %p144 = scmp.eq.s32.totalorder %s22, 1
      %p145 = scmp.ne.s32.totalorder %s140, %s142
      %p146 = scmp.eq.s32.totalorder %s22, 0
      %p147 = por %p145, %p146
      %p148 = scmp.ne.s32.totalorder %s140, %s142
      %p149 = scmp.eq.s32.totalorder %s27, 1
      %p150 = por %p148, %p149
      %p151 = scmp.ne.s32.totalorder %s142, %s143
      %p152 = scmp.eq.s32.totalorder %s27, 0
      %p153 = por %p151, %p152
      %p154 = scmp.ne.s32.totalorder %s142, %s143
      %p155 = scmp.eq.s32.totalorder %s28, 1
      %p156 = por %p154, %p155
      %p158 = scmp.ne.s32.totalorder %s143, %s157
      %p159 = scmp.eq.s32.totalorder %s28, 0
      %p160 = por %p158, %p159
      %s162 = sadd.s32 %s161, 1
      %p165 = scmp.eq.s32.totalorder %s22, 1
      %p166 = scmp.ne.s32.totalorder %s161, %s163
      %p167 = scmp.eq.s32.totalorder %s22, 0
      %p168 = por %p166, %p167
      %p169 = scmp.ne.s32.totalorder %s161, %s163
      %p170 = scmp.eq.s32.totalorder %s27, 1
      %p171 = por %p169, %p170
      %p172 = scmp.ne.s32.totalorder %s163, %s164
      %p173 = scmp.eq.s32.totalorder %s27, 0
      %p174 = por %p172, %p173
      %p175 = scmp.ne.s32.totalorder %s163, %s164
      %p176 = scmp.eq.s32.totalorder %s28, 1
      %p177 = por %p175, %p176
      %p179 = scmp.ne.s32.totalorder %s164, %s178
      %p180 = scmp.eq.s32.totalorder %s28, 0
      %p181 = por %p179, %p180
      %s182 = ssub.s32 %s22, %s29
      %p183 = scmp.eq.s32.totalorder %s182, 0
      %s185 = sadd.s32 %s184, 1
      %s186 = scalar_select %p183, %s184, %s185
      %p189 = pneg %p183
      %p190 = scmp.eq.s32.totalorder %s22, 1
      %p191 = por %p189, %p190
      %p192 = scmp.ne.s32.totalorder %s184, %s187
      %p193 = scmp.eq.s32.totalorder %s22, 0
      %p194 = por %p192, %p193
      %p195 = scmp.ne.s32.totalorder %s184, %s187
      %p196 = scmp.eq.s32.totalorder %s27, 1
      %p197 = por %p195, %p196
      %p198 = scmp.ne.s32.totalorder %s187, %s188
      %p199 = scmp.eq.s32.totalorder %s27, 0
      %p200 = por %p198, %p199
      %p201 = scmp.ne.s32.totalorder %s187, %s188
      %p202 = scmp.eq.s32.totalorder %s28, 1
      %p203 = por %p201, %p202
      %p205 = scmp.ne.s32.totalorder %s188, %s204
      %p206 = scmp.eq.s32.totalorder %s28, 0
      %p207 = por %p205, %p206
      %p208 = scmp.le.s32.totalorder 1, %s22
      %p209 = scmp.lt.s32.totalorder %s22, 3
      %p210 = pnand %p208, %p209
      %p211 = pneg %p210
      // Predicated region
      $region9: #{policy_forward.1} parent=5 // pred_check
        _
      $region10: #{policy_forward.1} parent=5 // pred_check_branch
        %213 = sbr.rel (%p210) target = $region12
      $region11: #{policy_forward.1} parent=5 // pred_region
        %s214 = ssub.s32 %s22, 1
        // Predicated region
        $region13: #{policy_forward.1} parent=11 // pred_check
          %p215 = pneg %p69
        $region14: #{policy_forward.1} parent=11 // pred_check_branch
          %217 = sbr.rel (%p215) target = $region16
        $region15: #{policy_forward.1} parent=11 // pred_region
          %s219 = ssub.s32 512, 512
          %220 = vsyncadd [#allocation6], %s219
          %s221 = sshll.u32 [#allocation5], 4
          %s222 = int_to_ptr.vmem [resolvable:$true] %s221
          %227 = dma.hbm_to_vmem [thread:$0]  %s1, 512, %s222, [#allocation6], 128, 128, 8
        $region16: #{policy_forward.1} parent=11 // pred_fallthru
          _
        // Predicated region
        $region17: #{policy_forward.1} parent=11 // pred_check
          %p228 = pneg %p90
        $region18: #{policy_forward.1} parent=11 // pred_check_branch
          %230 = sbr.rel (%p228) target = $region20
        $region19: #{policy_forward.1} parent=11 // pred_region
          %s232 = ssub.s32 16, 16
          %233 = vsyncadd [#allocation6], %s232
          %s235 = sshll.u32 [#allocation7], 4
          %s236 = int_to_ptr.vmem [resolvable:$true] %s235
          %238 = dma.hbm_to_vmem [thread:$0]  %s2, 16, %s236, [#allocation6]
        $region20: #{policy_forward.1} parent=11 // pred_fallthru
          _
        // Predicated region
        $region21: #{policy_forward.1} parent=11 // pred_check
          %p239 = pneg %p111
        $region22: #{policy_forward.1} parent=11 // pred_check_branch
          %241 = sbr.rel (%p239) target = $region24
        $region23: #{policy_forward.1} parent=11 // pred_region
          %s243 = ssub.s32 1024, 1024
          %244 = vsyncadd [#allocation9], %s243
          %s245 = sshll.u32 [#allocation8], 4
          %s246 = int_to_ptr.vmem [resolvable:$true] %s245
          %251 = dma.hbm_to_vmem [thread:$0]  %s3, 1024, %s246, [#allocation9], 128, 128, 8
        $region24: #{policy_forward.1} parent=11 // pred_fallthru
          _
        // Predicated region
        $region25: #{policy_forward.1} parent=11 // pred_check
          %p252 = pneg %p132
        $region26: #{policy_forward.1} parent=11 // pred_check_branch
          %254 = sbr.rel (%p252) target = $region28
        $region27: #{policy_forward.1} parent=11 // pred_region
          %s256 = ssub.s32 16, 16
          %257 = vsyncadd [#allocation9], %s256
          %s259 = sshll.u32 [#allocation10], 4
          %s260 = int_to_ptr.vmem [resolvable:$true] %s259
          %262 = dma.hbm_to_vmem [thread:$0]  %s4, 16, %s260, [#allocation9]
        $region28: #{policy_forward.1} parent=11 // pred_fallthru
          _
        // Predicated region
        $region29: #{policy_forward.1} parent=11 // pred_check
          %p263 = pneg %p153
        $region30: #{policy_forward.1} parent=11 // pred_check_branch
          %265 = sbr.rel (%p263) target = $region32
        $region31: #{policy_forward.1} parent=11 // pred_region
          %s267 = ssub.s32 512, 512
          %268 = vsyncadd [#allocation12], %s267
          %s269 = sshll.u32 [#allocation11], 4
          %s270 = int_to_ptr.vmem [resolvable:$true] %s269
          %275 = dma.hbm_to_vmem [thread:$0]  %s5, 512, %s270, [#allocation12], 128, 128, 8
        $region32: #{policy_forward.1} parent=11 // pred_fallthru
          _
        // Predicated region
        $region33: #{policy_forward.1} parent=11 // pred_check
          %p276 = pneg %p174
        $region34: #{policy_forward.1} parent=11 // pred_check_branch
          %278 = sbr.rel (%p276) target = $region36
        $region35: #{policy_forward.1} parent=11 // pred_region
          %s280 = ssub.s32 16, 16
          %281 = vsyncadd [#allocation12], %s280
          %s283 = sshll.u32 [#allocation13], 4
          %s284 = int_to_ptr.vmem [resolvable:$true] %s283
          %286 = dma.hbm_to_vmem [thread:$0]  %s6, 16, %s284, [#allocation12]
        $region36: #{policy_forward.1} parent=11 // pred_fallthru
          _
      $region12: #{policy_forward.1} parent=5 // pred_fallthru
        _
      %p287 = scmp.lt.s32.totalorder %s22, 2
      // Predicated region
      $region37: #{policy_forward.1} parent=5 // pred_check
        %p288 = pneg %p287
      $region38: #{policy_forward.1} parent=5 // pred_check_branch
        %290 = sbr.rel (%p288) target = $region40
      $region39: #{policy_forward.1} parent=5 // pred_region
        // Predicated region
        $region41: #{policy_forward.1} parent=39 // pred_check
          %p291 = pneg %p42
        $region42: #{policy_forward.1} parent=39 // pred_check_branch
          %293 = sbr.rel (%p291) target = $region44
        $region43: #{policy_forward.1} parent=39 // pred_region
          %s294 = sand.u32 %s32, 1
          %s295 = scalar_lea.sflag [#allocation3], %s294
          %s296 = sand.u32 %s32, 1
          %s297 = smul.addr %s296, 128
          %s298 = scalar_lea.vmem [#allocation2], %s297
          %s299 = smul.u32 16, %s22
          %s301 = ssub.s32 2048, 2048
          %302 = vsyncadd %s295, %s301
          %s303 = smul.addr %s299, 128
          %s304 = scalar_lea.hbm %s0, %s303
          %s305 = sshll.u32 %s298, 4
          %s306 = int_to_ptr.vmem [resolvable:$true] %s305
          %311 = dma.hbm_to_vmem [thread:$0]  %s304, 2048, %s306, %s295, 128, 128, 8
        $region44: #{policy_forward.1} parent=39 // pred_fallthru
          _
      $region40: #{policy_forward.1} parent=5 // pred_fallthru
        _
      %p312 = scmp.le.s32.totalorder 1, %s22
      %p313 = scmp.lt.s32.totalorder %s22, 3
      %p314 = pnand %p312, %p313
      %p315 = pneg %p314
      // Predicated region
      $region45: #{policy_forward.1} parent=5 // pred_check
        _
      $region46: #{policy_forward.1} parent=5 // pred_check_branch
        %317 = sbr.rel (%p314) target = $region48
      $region47: #{policy_forward.1} parent=5 // pred_region
        %s318 = ssub.s32 %s22, 1
        %s319 = sand.u32 %s35, 1
        %s320 = scalar_lea.sflag [#allocation3], %s319
        %s321 = sand.u32 %s35, 1
        %s322 = smul.addr %s321, 128
        %s323 = scalar_lea.vmem [#allocation2], %s322
        // Predicated region
        $region49: #{policy_forward.1} parent=47 // pred_check
          %p324 = pneg %p48
        $region50: #{policy_forward.1} parent=47 // pred_check_branch
          %326 = sbr.rel (%p324) target = $region52
        $region51: #{policy_forward.1} parent=47 // pred_region
          %327 = dma.done %s320, 2048
        $region52: #{policy_forward.1} parent=47 // pred_fallthru
          _
        // Predicated region
        $region53: #{policy_forward.1} parent=47 // pred_check
          %p328 = pneg %p69
        $region54: #{policy_forward.1} parent=47 // pred_check_branch
          %330 = sbr.rel (%p328) target = $region56
        $region55: #{policy_forward.1} parent=47 // pred_region
          %331 = dma.done [#allocation6], 512
        $region56: #{policy_forward.1} parent=47 // pred_fallthru
          _
        // Predicated region
        $region57: #{policy_forward.1} parent=47 // pred_check
          %p332 = pneg %p90
        $region58: #{policy_forward.1} parent=47 // pred_check_branch
          %334 = sbr.rel (%p332) target = $region60
        $region59: #{policy_forward.1} parent=47 // pred_region
          %335 = dma.done [#allocation6], 16
        $region60: #{policy_forward.1} parent=47 // pred_fallthru
          _
        // Predicated region
        $region61: #{policy_forward.1} parent=47 // pred_check
          %p336 = pneg %p111
        $region62: #{policy_forward.1} parent=47 // pred_check_branch
          %338 = sbr.rel (%p336) target = $region64
        $region63: #{policy_forward.1} parent=47 // pred_region
          %339 = dma.done [#allocation9], 1024
        $region64: #{policy_forward.1} parent=47 // pred_fallthru
          _
        // Predicated region
        $region65: #{policy_forward.1} parent=47 // pred_check
          %p340 = pneg %p132
        $region66: #{policy_forward.1} parent=47 // pred_check_branch
          %342 = sbr.rel (%p340) target = $region68
        $region67: #{policy_forward.1} parent=47 // pred_region
          %343 = dma.done [#allocation9], 16
        $region68: #{policy_forward.1} parent=47 // pred_fallthru
          _
        // Predicated region
        $region69: #{policy_forward.1} parent=47 // pred_check
          %p344 = pneg %p153
        $region70: #{policy_forward.1} parent=47 // pred_check_branch
          %346 = sbr.rel (%p344) target = $region72
        $region71: #{policy_forward.1} parent=47 // pred_region
          %347 = dma.done [#allocation12], 512
        $region72: #{policy_forward.1} parent=47 // pred_fallthru
          _
        // Predicated region
        $region73: #{policy_forward.1} parent=47 // pred_check
          %p348 = pneg %p174
        $region74: #{policy_forward.1} parent=47 // pred_check_branch
          %350 = sbr.rel (%p348) target = $region76
        $region75: #{policy_forward.1} parent=47 // pred_region
          %351 = dma.done [#allocation12], 16
        $region76: #{policy_forward.1} parent=47 // pred_fallthru
          _
        %s352 = sand.u32 %s35, 1
        %s353 = scalar_lea.sflag [#allocation3], %s352
        %s354 = sand.u32 %s35, 1
        %s355 = smul.addr %s354, 128
        %s356 = scalar_lea.vmem [#allocation2], %s355
        %p357 = pneg %p48
        %p358 = pneg %p45
        %p359 = pneg %p69
        %p360 = pneg %p66
        %p361 = pneg %p90
        %p362 = pneg %p87
        %p363 = pneg %p111
        %p364 = pneg %p108
        %p365 = pneg %p132
        %p366 = pneg %p129
        %p367 = pneg %p153
        %p368 = pneg %p150
        %p369 = pneg %p174
        %p370 = pneg %p171
        %p371 = pneg %p200
        %p372 = pneg %p197
        %s373 = sand.u32 %s187, 1
        %s374 = scalar_lea.sflag [#allocation4], %s373
        %s375 = sand.u32 %s187, 1
        %s376 = smul.addr %s375, 128
        %s377 = scalar_lea.vmem [#allocation14], %s376
        %s378 = smul.u32 16, %s27
        %s379 = smul.u32 16, %s27
        %v380 = vld [vmem:[%s323] sm:$0xff]
        %v381 = vld [vmem:[%s323 + $0x8] sm:$0xff]
        %v382 = vld [vmem:[%s323 + $0x10] sm:$0xff]
        %v383 = vld [vmem:[%s323 + $0x18] sm:$0xff]
        %v384 = vld [vmem:[%s323 + $0x20] sm:$0xff]
        %v385 = vld [vmem:[%s323 + $0x28] sm:$0xff]
        %v386 = vld [vmem:[%s323 + $0x30] sm:$0xff]
        %v387 = vld [vmem:[%s323 + $0x38] sm:$0xff]
        %v388 = vld [vmem:[%s323 + $0x40] sm:$0xff]
        %v389 = vld [vmem:[%s323 + $0x48] sm:$0xff]
        %v390 = vld [vmem:[%s323 + $0x50] sm:$0xff]
        %v391 = vld [vmem:[%s323 + $0x58] sm:$0xff]
        %v392 = vld [vmem:[%s323 + $0x60] sm:$0xff]
        %v393 = vld [vmem:[%s323 + $0x68] sm:$0xff]
        %v394 = vld [vmem:[%s323 + $0x70] sm:$0xff]
        %v395 = vld [vmem:[%s323 + $0x78] sm:$0xff]
        %v396 = vld [vmem:[#allocation5] sm:$0xff]
        %v397 = vld [vmem:[#allocation5 + $0x8] sm:$0xff]
        %v398 = vld [vmem:[#allocation5 + $0x10] sm:$0xff]
        %v399 = vld [vmem:[#allocation5 + $0x18] sm:$0xff]
        %v400 = vld [vmem:[#allocation7] sm:$0x1]
        %v402 = vlaneseq
        %v403 = vshrl.u32 %v402, 7
        %v404 = vsub.s32 0, %v403
        %v405 = vrot.slane %v400, %v404
        %vm407 = vcmask 261120
        %v409 = vsel %vm407, %v380, 0
        %v412 = vsel %vm407, %v381, 0
        %v415 = vsel %vm407, %v382, 0
        %v418 = vsel %vm407, %v383, 0
        %v421 = vsel %vm407, %v384, 0
        %v424 = vsel %vm407, %v385, 0
        %v427 = vsel %vm407, %v386, 0
        %v430 = vsel %vm407, %v387, 0
        %v433 = vsel %vm407, %v388, 0
        %v436 = vsel %vm407, %v389, 0
        %v439 = vsel %vm407, %v390, 0
        %v442 = vsel %vm407, %v391, 0
        %v445 = vsel %vm407, %v392, 0
        %v448 = vsel %vm407, %v393, 0
        %v451 = vsel %vm407, %v394, 0
        %v454 = vsel %vm407, %v395, 0
        %456 = vmatprep.subr.mxu0 0.0
        %457 = vmatpush1.msra.mxu0 %v396
        %458 = vmatprep.subr.mxu0 0.0
        %459 = vmatpush1.msra.mxu0 %v397
        %460 = vmatprep.subr.mxu0 0.0
        %461 = vmatpush1.msra.mxu0 %v398
        %462 = vmatprep.subr.mxu0 0.0
        %463 = vmatpush1.msra.mxu0 %v399
        %464 = vmatprep.subr.mxu0 0.0
        %465 = vmatpush1.msra.mxu0 0.0
        %466 = vmatprep.subr.mxu0 0.0
        %467 = vmatpush1.msra.mxu0 0.0
        %468 = vmatprep.subr.mxu0 0.0
        %469 = vmatpush1.msra.mxu0 0.0
        %470 = vmatprep.subr.mxu0 0.0
        %471 = vmatpush1.msra.mxu0 0.0
        %472 = vmatprep.subr.mxu0 0.0
        %473 = vmatpush1.msra.mxu0 0.0
        %474 = vmatprep.subr.mxu0 0.0
        %475 = vmatpush1.msra.mxu0 0.0
        %476 = vmatprep.subr.mxu0 0.0
        %477 = vmatpush1.msra.mxu0 0.0
        %478 = vmatprep.subr.mxu0 0.0
        %479 = vmatpush1.msra.mxu0 0.0
        %480 = vmatprep.subr.mxu0 0.0
        %481 = vmatpush1.msra.mxu0 0.0
        %482 = vmatprep.subr.mxu0 0.0
        %483 = vmatpush1.msra.mxu0 0.0
        %484 = vmatprep.subr.mxu0 0.0
        %485 = vmatpush1.msra.mxu0 0.0
        %486 = vmatprep.subr.mxu0 0.0
        %487 = vmatpush1.msra.mxu0 0.0
        %488 = vmatprep.subr.mxu0 0.0
        %489 = vmatpush1.msra.mxu0 0.0
        %490 = vmatprep.subr.mxu0 0.0
        %491 = vmatpush1.msra.mxu0 0.0
        %492 = vmatprep.subr.mxu0 0.0
        %493 = vmatpush1.msra.mxu0 0.0
        %494 = vmatprep.subr.mxu0 0.0
        %495 = vmatpush1.msra.mxu0 0.0
        %496 = vmatprep.subr.mxu0 0.0
        %497 = vmatpush1.msra.mxu0 0.0
        %498 = vmatprep.subr.mxu0 0.0
        %499 = vmatpush1.msra.mxu0 0.0
        %500 = vmatprep.subr.mxu0 0.0
        %501 = vmatpush1.msra.mxu0 0.0
        %502 = vmatprep.subr.mxu0 0.0
        %503 = vmatpush1.msra.mxu0 0.0
        %504 = vmatprep.subr.mxu0 0.0
        %505 = vmatpush1.msra.mxu0 0.0
        %506 = vmatprep.subr.mxu0 0.0
        %507 = vmatpush1.msra.mxu0 0.0
        %508 = vmatprep.subr.mxu0 0.0
        %509 = vmatpush1.msra.mxu0 0.0
        %510 = vmatprep.subr.mxu0 0.0
        %511 = vmatpush1.msra.mxu0 0.0
        %512 = vmatprep.subr.mxu0 0.0
        %513 = vmatpush1.msra.mxu0 0.0
        %514 = vmatprep.subr.mxu0 0.0
        %515 = vmatpush1.msra.mxu0 0.0
        %516 = vmatprep.subr.mxu0 0.0
        %517 = vmatpush1.msra.mxu0 0.0
        %518 = vmatprep.subr.mxu0 0.0
        %519 = vmatpush1.msra.mxu0 0.0
        %520 = vmatprep.mubr.f32.mxu0 0.0
        %521 = vmatmul.mubr.f32.gmra.mrb[0].mxu0 %v409
        %v522 = vpop.f32.mrb[0].mxu0
        %v523 = vadd.f32 %v405, %v522
        %v524 = vpop.f32.mrb[0].mxu0
        %525 = vmatprep.mubr.f32.mxu0 0.0
        %526 = vmatmul.mubr.f32.gmra.mrb[0].mxu0 %v412
        %v527 = vpop.f32.mrb[0].mxu0
        %v528 = vadd.f32 %v405, %v527
        %v529 = vpop.f32.mrb[0].mxu0
        %530 = vmatprep.mubr.f32.mxu0 0.0
        %531 = vmatmul.mubr.f32.gmra.mrb[0].mxu0 %v415
        %v532 = vpop.f32.mrb[0].mxu0
        %v533 = vadd.f32 %v405, %v532
        %v534 = vpop.f32.mrb[0].mxu0
        %535 = vmatprep.mubr.f32.mxu0 0.0
        %536 = vmatmul.mubr.f32.gmra.mrb[0].mxu0 %v418
        %v537 = vpop.f32.mrb[0].mxu0
        %v538 = vadd.f32 %v405, %v537
        %v539 = vpop.f32.mrb[0].mxu0
        %540 = vmatprep.mubr.f32.mxu0 0.0
        %541 = vmatmul.mubr.f32.gmra.mrb[0].mxu0 %v421
        %v542 = vpop.f32.mrb[0].mxu0
        %v543 = vadd.f32 %v405, %v542
        %v544 = vpop.f32.mrb[0].mxu0
        %545 = vmatprep.mubr.f32.mxu0 0.0
        %546 = vmatmul.mubr.f32.gmra.mrb[0].mxu0 %v424
        %v547 = vpop.f32.mrb[0].mxu0
        %v548 = vadd.f32 %v405, %v547
        %v549 = vpop.f32.mrb[0].mxu0
        %550 = vmatprep.mubr.f32.mxu0 0.0
        %551 = vmatmul.mubr.f32.gmra.mrb[0].mxu0 %v427
        %v552 = vpop.f32.mrb[0].mxu0
        %v553 = vadd.f32 %v405, %v552
        %v554 = vpop.f32.mrb[0].mxu0
        %555 = vmatprep.mubr.f32.mxu0 0.0
        %556 = vmatmul.mubr.f32.gmra.mrb[0].mxu0 %v430
        %v557 = vpop.f32.mrb[0].mxu0
        %v558 = vadd.f32 %v405, %v557
        %v559 = vpop.f32.mrb[0].mxu0
        %560 = vmatprep.mubr.f32.mxu0 0.0
        %561 = vmatmul.mubr.f32.gmra.mrb[0].mxu0 %v433
        %v562 = vpop.f32.mrb[0].mxu0
        %v563 = vadd.f32 %v405, %v562
        %v564 = vpop.f32.mrb[0].mxu0
        %565 = vmatprep.mubr.f32.mxu0 0.0
        %566 = vmatmul.mubr.f32.gmra.mrb[0].mxu0 %v436
        %v567 = vpop.f32.mrb[0].mxu0
        %v568 = vadd.f32 %v405, %v567
        %v569 = vpop.f32.mrb[0].mxu0
        %570 = vmatprep.mubr.f32.mxu0 0.0
        %571 = vmatmul.mubr.f32.gmra.mrb[0].mxu0 %v439
        %v572 = vpop.f32.mrb[0].mxu0
        %v573 = vadd.f32 %v405, %v572
        %v574 = vpop.f32.mrb[0].mxu0
        %575 = vmatprep.mubr.f32.mxu0 0.0
        %576 = vmatmul.mubr.f32.gmra.mrb[0].mxu0 %v442
        %v577 = vpop.f32.mrb[0].mxu0
        %v578 = vadd.f32 %v405, %v577
        %v579 = vpop.f32.mrb[0].mxu0
        %580 = vmatprep.mubr.f32.mxu0 0.0
        %581 = vmatmul.mubr.f32.gmra.mrb[0].mxu0 %v445
        %v582 = vpop.f32.mrb[0].mxu0
        %v583 = vadd.f32 %v405, %v582
        %v584 = vpop.f32.mrb[0].mxu0
        %585 = vmatprep.mubr.f32.mxu0 0.0
        %586 = vmatmul.mubr.f32.gmra.mrb[0].mxu0 %v448
        %v587 = vpop.f32.mrb[0].mxu0
        %v588 = vadd.f32 %v405, %v587
        %v589 = vpop.f32.mrb[0].mxu0
        %590 = vmatprep.mubr.f32.mxu0 0.0
        %591 = vmatmul.mubr.f32.gmra.mrb[0].mxu0 %v451
        %v592 = vpop.f32.mrb[0].mxu0
        %v593 = vadd.f32 %v405, %v592
        %v594 = vpop.f32.mrb[0].mxu0
        %595 = vmatprep.mubr.f32.mxu0 0.0
        %596 = vmatmul.mubr.f32.gmra.mrb[0].mxu0 %v454
        %v597 = vpop.f32.mrb[0].mxu0
        %v598 = vadd.f32 %v405, %v597
        %v599 = vpop.f32.mrb[0].mxu0
        %600 = vdwg.mxu0
        %v601 = vmax.f32 %v523, 0.0
        %v602 = vmax.f32 %v528, 0.0
        %v603 = vmax.f32 %v533, 0.0
        %v604 = vmax.f32 %v538, 0.0
        %v605 = vmax.f32 %v543, 0.0
        %v606 = vmax.f32 %v548, 0.0
        %v607 = vmax.f32 %v553, 0.0
        %v608 = vmax.f32 %v558, 0.0
        %v609 = vmax.f32 %v563, 0.0
        %v610 = vmax.f32 %v568, 0.0
        %v611 = vmax.f32 %v573, 0.0
        %v612 = vmax.f32 %v578, 0.0
        %v613 = vmax.f32 %v583, 0.0
        %v614 = vmax.f32 %v588, 0.0
        %v615 = vmax.f32 %v593, 0.0
        %v616 = vmax.f32 %v598, 0.0
        %v617 = vld [vmem:[#allocation8] sm:$0xff]
        %v618 = vld [vmem:[#allocation8 + $0x8] sm:$0xff]
        %v619 = vld [vmem:[#allocation8 + $0x10] sm:$0xff]
        %v620 = vld [vmem:[#allocation8 + $0x18] sm:$0xff]
        %v621 = vld [vmem:[#allocation8 + $0x20] sm:$0xff]
        %v622 = vld [vmem:[#allocation8 + $0x28] sm:$0xff]
        %v623 = vld [vmem:[#allocation8 + $0x30] sm:$0xff]
        %v624 = vld [vmem:[#allocation8 + $0x38] sm:$0xff]
        %v625 = vld [vmem:[#allocation10] sm:$0x1]
        %v627 = vlaneseq
        %v628 = vshrl.u32 %v627, 7
        %v629 = vsub.s32 0, %v628
        %v630 = vrot.slane %v625, %v629
        %vm632 = vcmask 523264
        %v634 = vsel %vm632, %v601, 0
        %v637 = vsel %vm632, %v602, 0
        %v640 = vsel %vm632, %v603, 0
        %v643 = vsel %vm632, %v604, 0
        %v646 = vsel %vm632, %v605, 0
        %v649 = vsel %vm632, %v606, 0
        %v652 = vsel %vm632, %v607, 0
        %v655 = vsel %vm632, %v608, 0
        %v658 = vsel %vm632, %v609, 0
        %v661 = vsel %vm632, %v610, 0
        %v664 = vsel %vm632, %v611, 0
        %v667 = vsel %vm632, %v612, 0
        %v670 = vsel %vm632, %v613, 0
        %v673 = vsel %vm632, %v614, 0
        %v676 = vsel %vm632, %v615, 0
        %v679 = vsel %vm632, %v616, 0
        %681 = vmatprep.subr.mxu0 0.0
        %682 = vmatpush1.msra.mxu0 %v617
        %683 = vmatprep.subr.mxu0 0.0
        %684 = vmatpush1.msra.mxu0 %v618
        %685 = vmatprep.subr.mxu0 0.0
        %686 = vmatpush1.msra.mxu0 %v619
        %687 = vmatprep.subr.mxu0 0.0
        %688 = vmatpush1.msra.mxu0 %v620
        %689 = vmatprep.subr.mxu0 0.0
        %690 = vmatpush1.msra.mxu0 %v621
        %691 = vmatprep.subr.mxu0 0.0
        %692 = vmatpush1.msra.mxu0 %v622
        %693 = vmatprep.subr.mxu0 0.0
        %694 = vmatpush1.msra.mxu0 %v623
        %695 = vmatprep.subr.mxu0 0.0
        %696 = vmatpush1.msra.mxu0 %v624
        %697 = vmatprep.subr.mxu0 0.0
        %698 = vmatpush1.msra.mxu0 0.0
        %699 = vmatprep.subr.mxu0 0.0
        %700 = vmatpush1.msra.mxu0 0.0
        %701 = vmatprep.subr.mxu0 0.0
        %702 = vmatpush1.msra.mxu0 0.0
        %703 = vmatprep.subr.mxu0 0.0
        %704 = vmatpush1.msra.mxu0 0.0
        %705 = vmatprep.subr.mxu0 0.0
        %706 = vmatpush1.msra.mxu0 0.0
        %707 = vmatprep.subr.mxu0 0.0
        %708 = vmatpush1.msra.mxu0 0.0
        %709 = vmatprep.subr.mxu0 0.0
        %710 = vmatpush1.msra.mxu0 0.0
        %711 = vmatprep.subr.mxu0 0.0
        %712 = vmatpush1.msra.mxu0 0.0
        %713 = vmatprep.subr.mxu0 0.0
        %714 = vmatpush1.msra.mxu0 0.0
        %715 = vmatprep.subr.mxu0 0.0
        %716 = vmatpush1.msra.mxu0 0.0
        %717 = vmatprep.subr.mxu0 0.0
        %718 = vmatpush1.msra.mxu0 0.0
        %719 = vmatprep.subr.mxu0 0.0
        %720 = vmatpush1.msra.mxu0 0.0
        %721 = vmatprep.subr.mxu0 0.0
        %722 = vmatpush1.msra.mxu0 0.0
        %723 = vmatprep.subr.mxu0 0.0
        %724 = vmatpush1.msra.mxu0 0.0
        %725 = vmatprep.subr.mxu0 0.0
        %726 = vmatpush1.msra.mxu0 0.0
        %727 = vmatprep.subr.mxu0 0.0
        %728 = vmatpush1.msra.mxu0 0.0
        %729 = vmatprep.subr.mxu0 0.0
        %730 = vmatpush1.msra.mxu0 0.0
        %731 = vmatprep.subr.mxu0 0.0
        %732 = vmatpush1.msra.mxu0 0.0
        %733 = vmatprep.subr.mxu0 0.0
        %734 = vmatpush1.msra.mxu0 0.0
        %735 = vmatprep.subr.mxu0 0.0
        %736 = vmatpush1.msra.mxu0 0.0
        %737 = vmatprep.subr.mxu0 0.0
        %738 = vmatpush1.msra.mxu0 0.0
        %739 = vmatprep.subr.mxu0 0.0
        %740 = vmatpush1.msra.mxu0 0.0
        %741 = vmatprep.subr.mxu0 0.0
        %742 = vmatpush1.msra.mxu0 0.0
        %743 = vmatprep.subr.mxu0 0.0
        %744 = vmatpush1.msra.mxu0 0.0
        %745 = vmatprep.mubr.f32.mxu0 0.0
        %746 = vmatmul.mubr.f32.gmra.mrb[0].mxu0 %v634
        %v747 = vpop.f32.mrb[0].mxu0
        %v748 = vadd.f32 %v630, %v747
        %v749 = vpop.f32.mrb[0].mxu0
        %750 = vmatprep.mubr.f32.mxu0 0.0
        %751 = vmatmul.mubr.f32.gmra.mrb[0].mxu0 %v637
        %v752 = vpop.f32.mrb[0].mxu0
        %v753 = vadd.f32 %v630, %v752
        %v754 = vpop.f32.mrb[0].mxu0
        %755 = vmatprep.mubr.f32.mxu0 0.0
        %756 = vmatmul.mubr.f32.gmra.mrb[0].mxu0 %v640
        %v757 = vpop.f32.mrb[0].mxu0
        %v758 = vadd.f32 %v630, %v757
        %v759 = vpop.f32.mrb[0].mxu0
        %760 = vmatprep.mubr.f32.mxu0 0.0
        %761 = vmatmul.mubr.f32.gmra.mrb[0].mxu0 %v643
        %v762 = vpop.f32.mrb[0].mxu0
        %v763 = vadd.f32 %v630, %v762
        %v764 = vpop.f32.mrb[0].mxu0
        %765 = vmatprep.mubr.f32.mxu0 0.0
        %766 = vmatmul.mubr.f32.gmra.mrb[0].mxu0 %v646
        %v767 = vpop.f32.mrb[0].mxu0
        %v768 = vadd.f32 %v630, %v767
        %v769 = vpop.f32.mrb[0].mxu0
        %770 = vmatprep.mubr.f32.mxu0 0.0
        %771 = vmatmul.mubr.f32.gmra.mrb[0].mxu0 %v649
        %v772 = vpop.f32.mrb[0].mxu0
        %v773 = vadd.f32 %v630, %v772
        %v774 = vpop.f32.mrb[0].mxu0
        %775 = vmatprep.mubr.f32.mxu0 0.0
        %776 = vmatmul.mubr.f32.gmra.mrb[0].mxu0 %v652
        %v777 = vpop.f32.mrb[0].mxu0
        %v778 = vadd.f32 %v630, %v777
        %v779 = vpop.f32.mrb[0].mxu0
        %780 = vmatprep.mubr.f32.mxu0 0.0
        %781 = vmatmul.mubr.f32.gmra.mrb[0].mxu0 %v655
        %v782 = vpop.f32.mrb[0].mxu0
        %v783 = vadd.f32 %v630, %v782
        %v784 = vpop.f32.mrb[0].mxu0
        %785 = vmatprep.mubr.f32.mxu0 0.0
        %786 = vmatmul.mubr.f32.gmra.mrb[0].mxu0 %v658
        %v787 = vpop.f32.mrb[0].mxu0
        %v788 = vadd.f32 %v630, %v787
        %v789 = vpop.f32.mrb[0].mxu0
        %790 = vmatprep.mubr.f32.mxu0 0.0
        %791 = vmatmul.mubr.f32.gmra.mrb[0].mxu0 %v661
        %v792 = vpop.f32.mrb[0].mxu0
        %v793 = vadd.f32 %v630, %v792
        %v794 = vpop.f32.mrb[0].mxu0
        %795 = vmatprep.mubr.f32.mxu0 0.0
        %796 = vmatmul.mubr.f32.gmra.mrb[0].mxu0 %v664
        %v797 = vpop.f32.mrb[0].mxu0
        %v798 = vadd.f32 %v630, %v797
        %v799 = vpop.f32.mrb[0].mxu0
        %800 = vmatprep.mubr.f32.mxu0 0.0
        %801 = vmatmul.mubr.f32.gmra.mrb[0].mxu0 %v667
        %v802 = vpop.f32.mrb[0].mxu0
        %v803 = vadd.f32 %v630, %v802
        %v804 = vpop.f32.mrb[0].mxu0
        %805 = vmatprep.mubr.f32.mxu0 0.0
        %806 = vmatmul.mubr.f32.gmra.mrb[0].mxu0 %v670
        %v807 = vpop.f32.mrb[0].mxu0
        %v808 = vadd.f32 %v630, %v807
        %v809 = vpop.f32.mrb[0].mxu0
        %810 = vmatprep.mubr.f32.mxu0 0.0
        %811 = vmatmul.mubr.f32.gmra.mrb[0].mxu0 %v673
        %v812 = vpop.f32.mrb[0].mxu0
        %v813 = vadd.f32 %v630, %v812
        %v814 = vpop.f32.mrb[0].mxu0
        %815 = vmatprep.mubr.f32.mxu0 0.0
        %816 = vmatmul.mubr.f32.gmra.mrb[0].mxu0 %v676
        %v817 = vpop.f32.mrb[0].mxu0
        %v818 = vadd.f32 %v630, %v817
        %v819 = vpop.f32.mrb[0].mxu0
        %820 = vmatprep.mubr.f32.mxu0 0.0
        %821 = vmatmul.mubr.f32.gmra.mrb[0].mxu0 %v679
        %v822 = vpop.f32.mrb[0].mxu0
        %v823 = vadd.f32 %v630, %v822
        %v824 = vpop.f32.mrb[0].mxu0
        %825 = vdwg.mxu0
        %v826 = vmax.f32 %v748, 0.0
        %v827 = vmax.f32 %v753, 0.0
        %v828 = vmax.f32 %v758, 0.0
        %v829 = vmax.f32 %v763, 0.0
        %v830 = vmax.f32 %v768, 0.0
        %v831 = vmax.f32 %v773, 0.0
        %v832 = vmax.f32 %v778, 0.0
        %v833 = vmax.f32 %v783, 0.0
        %v834 = vmax.f32 %v788, 0.0
        %v835 = vmax.f32 %v793, 0.0
        %v836 = vmax.f32 %v798, 0.0
        %v837 = vmax.f32 %v803, 0.0
        %v838 = vmax.f32 %v808, 0.0
        %v839 = vmax.f32 %v813, 0.0
        %v840 = vmax.f32 %v818, 0.0
        %v841 = vmax.f32 %v823, 0.0
        %v842 = vld [vmem:[#allocation11] sm:$0xff]
        %v843 = vld [vmem:[#allocation11 + $0x8] sm:$0xff]
        %v844 = vld [vmem:[#allocation11 + $0x10] sm:$0xff]
        %v845 = vld [vmem:[#allocation11 + $0x18] sm:$0xff]
        %v846 = vld [vmem:[#allocation13] sm:$0x1]
        %v848 = vlaneseq
        %v849 = vshrl.u32 %v848, 7
        %v850 = vsub.s32 0, %v849
        %v851 = vrot.slane %v846, %v850
        %v854 = vsel %vm407, %v826, 0
        %v857 = vsel %vm407, %v827, 0
        %v860 = vsel %vm407, %v828, 0
        %v863 = vsel %vm407, %v829, 0
        %v866 = vsel %vm407, %v830, 0
        %v869 = vsel %vm407, %v831, 0
        %v872 = vsel %vm407, %v832, 0
        %v875 = vsel %vm407, %v833, 0
        %v878 = vsel %vm407, %v834, 0
        %v881 = vsel %vm407, %v835, 0
        %v884 = vsel %vm407, %v836, 0
        %v887 = vsel %vm407, %v837, 0
        %v890 = vsel %vm407, %v838, 0
        %v893 = vsel %vm407, %v839, 0
        %v896 = vsel %vm407, %v840, 0
        %v899 = vsel %vm407, %v841, 0
        %901 = vmatprep.subr.mxu0 0.0
        %902 = vmatpush1.msra.mxu0 %v842
        %903 = vmatprep.subr.mxu0 0.0
        %904 = vmatpush1.msra.mxu0 %v843
        %905 = vmatprep.subr.mxu0 0.0
        %906 = vmatpush1.msra.mxu0 %v844
        %907 = vmatprep.subr.mxu0 0.0
        %908 = vmatpush1.msra.mxu0 %v845
        %909 = vmatprep.subr.mxu0 0.0
        %910 = vmatpush1.msra.mxu0 0.0
        %911 = vmatprep.subr.mxu0 0.0
        %912 = vmatpush1.msra.mxu0 0.0
        %913 = vmatprep.subr.mxu0 0.0
        %914 = vmatpush1.msra.mxu0 0.0
        %915 = vmatprep.subr.mxu0 0.0
        %916 = vmatpush1.msra.mxu0 0.0
        %917 = vmatprep.subr.mxu0 0.0
        %918 = vmatpush1.msra.mxu0 0.0
        %919 = vmatprep.subr.mxu0 0.0
        %920 = vmatpush1.msra.mxu0 0.0
        %921 = vmatprep.subr.mxu0 0.0
        %922 = vmatpush1.msra.mxu0 0.0
        %923 = vmatprep.subr.mxu0 0.0
        %924 = vmatpush1.msra.mxu0 0.0
        %925 = vmatprep.subr.mxu0 0.0
        %926 = vmatpush1.msra.mxu0 0.0
        %927 = vmatprep.subr.mxu0 0.0
        %928 = vmatpush1.msra.mxu0 0.0
        %929 = vmatprep.subr.mxu0 0.0
        %930 = vmatpush1.msra.mxu0 0.0
        %931 = vmatprep.subr.mxu0 0.0
        %932 = vmatpush1.msra.mxu0 0.0
        %933 = vmatprep.subr.mxu0 0.0
        %934 = vmatpush1.msra.mxu0 0.0
        %935 = vmatprep.subr.mxu0 0.0
        %936 = vmatpush1.msra.mxu0 0.0
        %937 = vmatprep.subr.mxu0 0.0
        %938 = vmatpush1.msra.mxu0 0.0
        %939 = vmatprep.subr.mxu0 0.0
        %940 = vmatpush1.msra.mxu0 0.0
        %941 = vmatprep.subr.mxu0 0.0
        %942 = vmatpush1.msra.mxu0 0.0
        %943 = vmatprep.subr.mxu0 0.0
        %944 = vmatpush1.msra.mxu0 0.0
        %945 = vmatprep.subr.mxu0 0.0
        %946 = vmatpush1.msra.mxu0 0.0
        %947 = vmatprep.subr.mxu0 0.0
        %948 = vmatpush1.msra.mxu0 0.0
        %949 = vmatprep.subr.mxu0 0.0
        %950 = vmatpush1.msra.mxu0 0.0
        %951 = vmatprep.subr.mxu0 0.0
        %952 = vmatpush1.msra.mxu0 0.0
        %953 = vmatprep.subr.mxu0 0.0
        %954 = vmatpush1.msra.mxu0 0.0
        %955 = vmatprep.subr.mxu0 0.0
        %956 = vmatpush1.msra.mxu0 0.0
        %957 = vmatprep.subr.mxu0 0.0
        %958 = vmatpush1.msra.mxu0 0.0
        %959 = vmatprep.subr.mxu0 0.0
        %960 = vmatpush1.msra.mxu0 0.0
        %961 = vmatprep.subr.mxu0 0.0
        %962 = vmatpush1.msra.mxu0 0.0
        %963 = vmatprep.subr.mxu0 0.0
        %964 = vmatpush1.msra.mxu0 0.0
        %965 = vmatprep.mubr.f32.mxu0 0.0
        %966 = vmatmul.mubr.f32.gmra.mrb[0].mxu0 %v854
        %v967 = vpop.f32.mrb[0].mxu0
        %v968 = vadd.f32 %v851, %v967
        %v969 = vpop.f32.mrb[0].mxu0
        %970 = vmatprep.mubr.f32.mxu0 0.0
        %971 = vmatmul.mubr.f32.gmra.mrb[0].mxu0 %v857
        %v972 = vpop.f32.mrb[0].mxu0
        %v973 = vadd.f32 %v851, %v972
        %v974 = vpop.f32.mrb[0].mxu0
        %975 = vmatprep.mubr.f32.mxu0 0.0
        %976 = vmatmul.mubr.f32.gmra.mrb[0].mxu0 %v860
        %v977 = vpop.f32.mrb[0].mxu0
        %v978 = vadd.f32 %v851, %v977
        %v979 = vpop.f32.mrb[0].mxu0
        %980 = vmatprep.mubr.f32.mxu0 0.0
        %981 = vmatmul.mubr.f32.gmra.mrb[0].mxu0 %v863
        %v982 = vpop.f32.mrb[0].mxu0
        %v983 = vadd.f32 %v851, %v982
        %v984 = vpop.f32.mrb[0].mxu0
        %985 = vmatprep.mubr.f32.mxu0 0.0
        %986 = vmatmul.mubr.f32.gmra.mrb[0].mxu0 %v866
        %v987 = vpop.f32.mrb[0].mxu0
        %v988 = vadd.f32 %v851, %v987
        %v989 = vpop.f32.mrb[0].mxu0
        %990 = vmatprep.mubr.f32.mxu0 0.0
        %991 = vmatmul.mubr.f32.gmra.mrb[0].mxu0 %v869
        %v992 = vpop.f32.mrb[0].mxu0
        %v993 = vadd.f32 %v851, %v992
        %v994 = vpop.f32.mrb[0].mxu0
        %995 = vmatprep.mubr.f32.mxu0 0.0
        %996 = vmatmul.mubr.f32.gmra.mrb[0].mxu0 %v872
        %v997 = vpop.f32.mrb[0].mxu0
        %v998 = vadd.f32 %v851, %v997
        %v999 = vpop.f32.mrb[0].mxu0
        %1000 = vmatprep.mubr.f32.mxu0 0.0
        %1001 = vmatmul.mubr.f32.gmra.mrb[0].mxu0 %v875
        %v1002 = vpop.f32.mrb[0].mxu0
        %v1003 = vadd.f32 %v851, %v1002
        %v1004 = vpop.f32.mrb[0].mxu0
        %1005 = vmatprep.mubr.f32.mxu0 0.0
        %1006 = vmatmul.mubr.f32.gmra.mrb[0].mxu0 %v878
        %v1007 = vpop.f32.mrb[0].mxu0
        %v1008 = vadd.f32 %v851, %v1007
        %v1009 = vpop.f32.mrb[0].mxu0
        %1010 = vmatprep.mubr.f32.mxu0 0.0
        %1011 = vmatmul.mubr.f32.gmra.mrb[0].mxu0 %v881
        %v1012 = vpop.f32.mrb[0].mxu0
        %v1013 = vadd.f32 %v851, %v1012
        %v1014 = vpop.f32.mrb[0].mxu0
        %1015 = vmatprep.mubr.f32.mxu0 0.0
        %1016 = vmatmul.mubr.f32.gmra.mrb[0].mxu0 %v884
        %v1017 = vpop.f32.mrb[0].mxu0
        %v1018 = vadd.f32 %v851, %v1017
        %v1019 = vpop.f32.mrb[0].mxu0
        %1020 = vmatprep.mubr.f32.mxu0 0.0
        %1021 = vmatmul.mubr.f32.gmra.mrb[0].mxu0 %v887
        %v1022 = vpop.f32.mrb[0].mxu0
        %v1023 = vadd.f32 %v851, %v1022
        %v1024 = vpop.f32.mrb[0].mxu0
        %1025 = vmatprep.mubr.f32.mxu0 0.0
        %1026 = vmatmul.mubr.f32.gmra.mrb[0].mxu0 %v890
        %v1027 = vpop.f32.mrb[0].mxu0
        %v1028 = vadd.f32 %v851, %v1027
        %v1029 = vpop.f32.mrb[0].mxu0
        %1030 = vmatprep.mubr.f32.mxu0 0.0
        %1031 = vmatmul.mubr.f32.gmra.mrb[0].mxu0 %v893
        %v1032 = vpop.f32.mrb[0].mxu0
        %v1033 = vadd.f32 %v851, %v1032
        %v1034 = vpop.f32.mrb[0].mxu0
        %1035 = vmatprep.mubr.f32.mxu0 0.0
        %1036 = vmatmul.mubr.f32.gmra.mrb[0].mxu0 %v896
        %v1037 = vpop.f32.mrb[0].mxu0
        %v1038 = vadd.f32 %v851, %v1037
        %v1039 = vpop.f32.mrb[0].mxu0
        %1040 = vmatprep.mubr.f32.mxu0 0.0
        %1041 = vmatmul.mubr.f32.gmra.mrb[0].mxu0 %v899
        %v1042 = vpop.f32.mrb[0].mxu0
        %v1043 = vadd.f32 %v851, %v1042
        %v1044 = vpop.f32.mrb[0].mxu0
        %1045 = vdwg.mxu0
        %1046 = vmax.xlane.f32.xlu0 %v968
        %v1047 = vpop.xlane.xlu0 %1046
        %1048 = vmax.xlane.f32.xlu0 %v973
        %v1049 = vpop.xlane.xlu0 %1048
        %1050 = vmax.xlane.f32.xlu0 %v978
        %v1051 = vpop.xlane.xlu0 %1050
        %1052 = vmax.xlane.f32.xlu0 %v983
        %v1053 = vpop.xlane.xlu0 %1052
        %1054 = vmax.xlane.f32.xlu0 %v988
        %v1055 = vpop.xlane.xlu0 %1054
        %1056 = vmax.xlane.f32.xlu0 %v993
        %v1057 = vpop.xlane.xlu0 %1056
        %1058 = vmax.xlane.f32.xlu0 %v998
        %v1059 = vpop.xlane.xlu0 %1058
        %1060 = vmax.xlane.f32.xlu0 %v1003
        %v1061 = vpop.xlane.xlu0 %1060
        %1062 = vmax.xlane.f32.xlu0 %v1008
        %v1063 = vpop.xlane.xlu0 %1062
        %1064 = vmax.xlane.f32.xlu0 %v1013
        %v1065 = vpop.xlane.xlu0 %1064
        %1066 = vmax.xlane.f32.xlu0 %v1018
        %v1067 = vpop.xlane.xlu0 %1066
        %1068 = vmax.xlane.f32.xlu0 %v1023
        %v1069 = vpop.xlane.xlu0 %1068
        %1070 = vmax.xlane.f32.xlu0 %v1028
        %v1071 = vpop.xlane.xlu0 %1070
        %1072 = vmax.xlane.f32.xlu0 %v1033
        %v1073 = vpop.xlane.xlu0 %1072
        %1074 = vmax.xlane.f32.xlu0 %v1038
        %v1075 = vpop.xlane.xlu0 %1074
        %1076 = vmax.xlane.f32.xlu0 %v1043
        %v1077 = vpop.xlane.xlu0 %1076
        %v1078 = vsub.f32 %v968, %v1047
        %v1079 = vsub.f32 %v973, %v1049
        %v1080 = vsub.f32 %v978, %v1051
        %v1081 = vsub.f32 %v983, %v1053
        %v1082 = vsub.f32 %v988, %v1055
        %v1083 = vsub.f32 %v993, %v1057
        %v1084 = vsub.f32 %v998, %v1059
        %v1085 = vsub.f32 %v1003, %v1061
        %v1086 = vsub.f32 %v1008, %v1063
        %v1087 = vsub.f32 %v1013, %v1065
        %v1088 = vsub.f32 %v1018, %v1067
        %v1089 = vsub.f32 %v1023, %v1069
        %v1090 = vsub.f32 %v1028, %v1071
        %v1091 = vsub.f32 %v1033, %v1073
        %v1092 = vsub.f32 %v1038, %v1075
        %v1093 = vsub.f32 %v1043, %v1077
        %v1094 = vmul.f32 %v1078, 1.442695
        %v1095 = vpow.pop %v1094
        %v1096 = vmul.f32 %v1079, 1.442695
        %v1097 = vpow.pop %v1096
        %v1098 = vmul.f32 %v1080, 1.442695
        %v1099 = vpow.pop %v1098
        %v1100 = vmul.f32 %v1081, 1.442695
        %v1101 = vpow.pop %v1100
        %v1102 = vmul.f32 %v1082, 1.442695
        %v1103 = vpow.pop %v1102
        %v1104 = vmul.f32 %v1083, 1.442695
        %v1105 = vpow.pop %v1104
        %v1106 = vmul.f32 %v1084, 1.442695
        %v1107 = vpow.pop %v1106
        %v1108 = vmul.f32 %v1085, 1.442695
        %v1109 = vpow.pop %v1108
        %v1110 = vmul.f32 %v1086, 1.442695
        %v1111 = vpow.pop %v1110
        %v1112 = vmul.f32 %v1087, 1.442695
        %v1113 = vpow.pop %v1112
        %v1114 = vmul.f32 %v1088, 1.442695
        %v1115 = vpow.pop %v1114
        %v1116 = vmul.f32 %v1089, 1.442695
        %v1117 = vpow.pop %v1116
        %v1118 = vmul.f32 %v1090, 1.442695
        %v1119 = vpow.pop %v1118
        %v1120 = vmul.f32 %v1091, 1.442695
        %v1121 = vpow.pop %v1120
        %v1122 = vmul.f32 %v1092, 1.442695
        %v1123 = vpow.pop %v1122
        %v1124 = vmul.f32 %v1093, 1.442695
        %v1125 = vpow.pop %v1124
        %1126 = vadd.xlane.f32.xlu0 %v1095
        %v1127 = vpop.xlane.xlu0 %1126
        %1128 = vadd.xlane.f32.xlu0 %v1097
        %v1129 = vpop.xlane.xlu0 %1128
        %1130 = vadd.xlane.f32.xlu0 %v1099
        %v1131 = vpop.xlane.xlu0 %1130
        %1132 = vadd.xlane.f32.xlu0 %v1101
        %v1133 = vpop.xlane.xlu0 %1132
        %1134 = vadd.xlane.f32.xlu0 %v1103
        %v1135 = vpop.xlane.xlu0 %1134
        %1136 = vadd.xlane.f32.xlu0 %v1105
        %v1137 = vpop.xlane.xlu0 %1136
        %1138 = vadd.xlane.f32.xlu0 %v1107
        %v1139 = vpop.xlane.xlu0 %1138
        %1140 = vadd.xlane.f32.xlu0 %v1109
        %v1141 = vpop.xlane.xlu0 %1140
        %1142 = vadd.xlane.f32.xlu0 %v1111
        %v1143 = vpop.xlane.xlu0 %1142
        %1144 = vadd.xlane.f32.xlu0 %v1113
        %v1145 = vpop.xlane.xlu0 %1144
        %1146 = vadd.xlane.f32.xlu0 %v1115
        %v1147 = vpop.xlane.xlu0 %1146
        %1148 = vadd.xlane.f32.xlu0 %v1117
        %v1149 = vpop.xlane.xlu0 %1148
        %1150 = vadd.xlane.f32.xlu0 %v1119
        %v1151 = vpop.xlane.xlu0 %1150
        %1152 = vadd.xlane.f32.xlu0 %v1121
        %v1153 = vpop.xlane.xlu0 %1152
        %1154 = vadd.xlane.f32.xlu0 %v1123
        %v1155 = vpop.xlane.xlu0 %1154
        %1156 = vadd.xlane.f32.xlu0 %v1125
        %v1157 = vpop.xlane.xlu0 %1156
        %v1158 = vrcp.pop %v1127
        %v1159 = vrcp.pop %v1129
        %v1160 = vrcp.pop %v1131
        %v1161 = vrcp.pop %v1133
        %v1162 = vrcp.pop %v1135
        %v1163 = vrcp.pop %v1137
        %v1164 = vrcp.pop %v1139
        %v1165 = vrcp.pop %v1141
        %v1166 = vrcp.pop %v1143
        %v1167 = vrcp.pop %v1145
        %v1168 = vrcp.pop %v1147
        %v1169 = vrcp.pop %v1149
        %v1170 = vrcp.pop %v1151
        %v1171 = vrcp.pop %v1153
        %v1172 = vrcp.pop %v1155
        %v1173 = vrcp.pop %v1157
        %v1174 = vmul.f32 %v1095, %v1158
        %v1175 = vmul.f32 %v1097, %v1159
        %v1176 = vmul.f32 %v1099, %v1160
        %v1177 = vmul.f32 %v1101, %v1161
        %v1178 = vmul.f32 %v1103, %v1162
        %v1179 = vmul.f32 %v1105, %v1163
        %v1180 = vmul.f32 %v1107, %v1164
        %v1181 = vmul.f32 %v1109, %v1165
        %v1182 = vmul.f32 %v1111, %v1166
        %v1183 = vmul.f32 %v1113, %v1167
        %v1184 = vmul.f32 %v1115, %v1168
        %v1185 = vmul.f32 %v1117, %v1169
        %v1186 = vmul.f32 %v1119, %v1170
        %v1187 = vmul.f32 %v1121, %v1171
        %v1188 = vmul.f32 %v1123, %v1172
        %v1189 = vmul.f32 %v1125, %v1173
        %1190 = vst [vmem:[%s377] sm:$0xff] %v1174
        %1191 = vst [vmem:[%s377 + $0x8] sm:$0xff] %v1175
        %1192 = vst [vmem:[%s377 + $0x10] sm:$0xff] %v1176
        %1193 = vst [vmem:[%s377 + $0x18] sm:$0xff] %v1177
        %1194 = vst [vmem:[%s377 + $0x20] sm:$0xff] %v1178
        %1195 = vst [vmem:[%s377 + $0x28] sm:$0xff] %v1179
        %1196 = vst [vmem:[%s377 + $0x30] sm:$0xff] %v1180
        %1197 = vst [vmem:[%s377 + $0x38] sm:$0xff] %v1181
        %1198 = vst [vmem:[%s377 + $0x40] sm:$0xff] %v1182
        %1199 = vst [vmem:[%s377 + $0x48] sm:$0xff] %v1183
        %1200 = vst [vmem:[%s377 + $0x50] sm:$0xff] %v1184
        %1201 = vst [vmem:[%s377 + $0x58] sm:$0xff] %v1185
        %1202 = vst [vmem:[%s377 + $0x60] sm:$0xff] %v1186
        %1203 = vst [vmem:[%s377 + $0x68] sm:$0xff] %v1187
        %1204 = vst [vmem:[%s377 + $0x70] sm:$0xff] %v1188
        %1205 = vst [vmem:[%s377 + $0x78] sm:$0xff] %v1189
        %s1206 = sand.u32 %s187, 1
        %s1207 = scalar_lea.sflag [#allocation4], %s1206
        %s1208 = sand.u32 %s187, 1
        %s1209 = smul.addr %s1208, 128
        %s1210 = scalar_lea.vmem [#allocation14], %s1209
        // Predicated region
        $region77: #{policy_forward.1} parent=47 // pred_check
          %p1211 = pneg %p197
        $region78: #{policy_forward.1} parent=47 // pred_check_branch
          %1213 = sbr.rel (%p1211) target = $region80
        $region79: #{policy_forward.1} parent=47 // pred_region
          %s1214 = smul.u32 16, %s27
          %s1216 = ssub.s32 2048, 2048
          %1217 = vsyncadd %s1207, %s1216
          %s1218 = smul.addr %s1214, 128
          %s1219 = scalar_lea.hbm %s7, %s1218
          %s1220 = sshll.u32 %s1210, 4
          %s1221 = int_to_ptr.vmem [resolvable:$true] %s1220
          %1226 = dma.vmem_to_hbm [thread:$0]  %s1221, 2048, %s1219, %s1207, 128, 128, 8
        $region80: #{policy_forward.1} parent=47 // pred_fallthru
          _
      $region48: #{policy_forward.1} parent=5 // pred_fallthru
        _
      %p1227 = scmp.le.s32.totalorder 2, %s22
      // Predicated region
      $region81: #{policy_forward.1} parent=5 // pred_check
        %p1228 = pneg %p1227
      $region82: #{policy_forward.1} parent=5 // pred_check_branch
        %1230 = sbr.rel (%p1228) target = $region84
      $region83: #{policy_forward.1} parent=5 // pred_region
        %s1231 = ssub.s32 %s22, 2
        // Predicated region
        $region85: #{policy_forward.1} parent=83 // pred_check
          %p1232 = pneg %p203
        $region86: #{policy_forward.1} parent=83 // pred_check_branch
          %1234 = sbr.rel (%p1232) target = $region88
        $region87: #{policy_forward.1} parent=83 // pred_region
          %s1235 = sand.u32 %s188, 1
          %s1236 = scalar_lea.sflag [#allocation4], %s1235
          %s1237 = sand.u32 %s188, 1
          %s1238 = smul.addr %s1237, 128
          %s1239 = scalar_lea.vmem [#allocation14], %s1238
          %1240 = dma.done %s1236, 2048
        $region88: #{policy_forward.1} parent=83 // pred_fallthru
          _
      $region84: #{policy_forward.1} parent=5 // pred_fallthru
        _
    $region6: #{policy_forward.1} parent=1 // loop_footer
      %s26 = sadd.s32 1, %s22
    $region7: #{policy_forward.1} parent=1 // loop_footer_branch
      %21 = sbr.rel target = $region3
    $region8: #{policy_forward.1} parent=1 // loop_exit
      _
    %1241 = vsyncpa [#allocation3], 1
    %s1242 = scalar_lea.sflag [#allocation3], 1
    %1243 = vsyncpa %s1242, 1
    %1244 = vsyncpa [#allocation6], 1
    %1245 = vsyncpa [#allocation9], 1
    %1246 = vsyncpa [#allocation12], 1
    %1247 = vsyncpa [#allocation4], 1
    %s1248 = scalar_lea.sflag [#allocation4], 1
    %1249 = vsyncpa %s1248, 1

</llo_original>
